<compile_context>
chip_gen: v5e
topology: v5e:2x2
jax: 0.10.0
libtpu: 0.0.40
codegen_flags: <defaults>
</compile_context>

<pallas_src>
import functools

import jax
import jax.numpy as jnp
from jax.experimental import pallas as pl
from jax.experimental.pallas import tpu as pltpu


# ----------------------------------------------------------------------------- helpers
def _round_up(a, b):
    return ((a + b - 1) // b) * b


def _round_down(a, b):
    return (a // b) * b


def _vmem_capacity_bytes():
    """Physical VMEM of the current TPU generation (conservative fallback)."""
    try:
        info = pltpu.get_tpu_info()
        cap = getattr(info, "vmem_capacity_bytes", None)
        if cap:
            return int(cap)
    except Exception:
        pass
    return 64 << 20  # v7x per-TC size; safe lower bound for v5e/v6e too


def _choose_tk(H, max_tk=1024):
    """Largest multiple of 128 that divides H (<= max_tk); H if none."""
    if H % 128 != 0:
        return H
    best = 128
    t = 128
    while t <= min(H, max_tk):
        if H % t == 0:
            best = t
        t += 128
    return best


# ----------------------------------------------------------------------------- kernels
def _layernorm_epilogue(h, res_ref, p_ref, o_ref, eps):
    """h: (tm, H) f32 dense output (incl. nothing yet); adds bias+residual, LN."""
    p = p_ref[...].astype(jnp.float32)              # (3, H): bias / gamma / beta
    bias, gamma, beta = p[0:1, :], p[1:2, :], p[2:3, :]

    # Dropout (eval mode) -> identity; bias + residual add in f32.
    y = h + bias + res_ref[...].astype(jnp.float32)

    # One-pass LayerNorm stats: var = E[y^2] - mean^2 (fewer f32 temporaries).
    inv_h = 1.0 / y.shape[-1]
    s1 = jnp.sum(y, axis=-1, keepdims=True)
    s2 = jnp.sum(y * y, axis=-1, keepdims=True)
    mean = s1 * inv_h
    var = jnp.maximum(s2 * inv_h - mean * mean, 0.0)
    inv = jax.lax.rsqrt(var + eps)
    o_ref[...] = ((y - mean) * (inv * gamma) + beta).astype(o_ref.dtype)


def _fusion_kernel_resident(x_ref, res_ref, w_ref, p_ref, o_ref, *, eps, mxu_dtype):
    # x_ref:(tm,H)  res_ref:(tm,H)  w_ref:(H,H) (out,in) resident  p_ref:(3,H)
    x = x_ref[...]
    if mxu_dtype is not None and x.dtype != mxu_dtype:
        x = x.astype(mxu_dtype)                      # VPU cast, hidden under MXU
    # Contract x's H_in with weight's dim 1 (in): x @ W^T without any HBM/VMEM
    # pre-transpose of the weight.
    h = jax.lax.dot_general(x, w_ref[...], (((1,), (1,)), ((), ())),
                            preferred_element_type=jnp.float32)
    _layernorm_epilogue(h, res_ref, p_ref, o_ref, eps)


def _fusion_kernel_ktiled(x_ref, res_ref, w_ref, p_ref, o_ref, acc_ref, *, eps, mxu_dtype):
    # x_ref:(tm,tk)  res_ref:(tm,H)  w_ref:(H,tk)  p_ref:(3,H)  acc_ref:(tm,H) f32
    k = pl.program_id(1)

    @pl.when(k == 0)
    def _():
        acc_ref[...] = jnp.zeros_like(acc_ref)

    x = x_ref[...]
    if mxu_dtype is not None and x.dtype != mxu_dtype:
        x = x.astype(mxu_dtype)
    acc_ref[...] += jax.lax.dot_general(x, w_ref[...], (((1,), (1,)), ((), ())),
                                        preferred_element_type=jnp.float32)

    @pl.when(k == pl.num_programs(1) - 1)
    def _():
        _layernorm_epilogue(acc_ref[...], res_ref, p_ref, o_ref, eps)


# ----------------------------------------------------------------------------- wrapper
def ud_repr_fusion_layer(hidden_states, input_tensor, weight, bias, gamma, beta,
                         *, eps=1e-12, row_tile=512, compute_dtype=None,
                         force_k_tiles=None):
    """Fused Linear(+bias) -> dropout(identity) -> +residual -> LayerNorm.

    hidden_states, input_tensor: (B, S, H)
    weight: (H, H) in PyTorch nn.Linear (out, in) layout — used as-is.
    bias, gamma, beta: (H,)
    compute_dtype: optional MXU dtype (e.g. jnp.bfloat16); accumulation stays f32.
    """
    B, S, H = hidden_states.shape
    M = B * S
    dtype = hidden_states.dtype
    in_isz = jnp.dtype(dtype).itemsize

    # Optional one-time weight cast (MXU rate + halves resident VMEM footprint).
    if compute_dtype is not None and jnp.dtype(weight.dtype) != jnp.dtype(compute_dtype):
        w_in = weight.astype(compute_dtype)
    else:
        w_in = weight
    w_isz = jnp.dtype(w_in.dtype).itemsize
    mxu_dtype = None if compute_dtype is None else jnp.dtype(compute_dtype)

    # Reshapes are metadata-only (no HBM copy); no padding, no output slice.
    x2d = hidden_states.reshape(M, H)
    r2d = input_tensor.reshape(M, H)
    params = jnp.stack([bias, gamma, beta], axis=0)          # (3, H), one DMA stream

    row_align = 16 if jnp.dtype(dtype) == jnp.dtype(jnp.bfloat16) else 8
    budget = int(0.75 * _vmem_capacity_bytes())              # generation-aware headroom

    # Row-tile upper bound: never larger than M (so only the ragged *last* grid
    # block is partially masked), sublane aligned.
    if M < row_align:
        tm_cap = M                                           # block == full row dim
    else:
        tm_cap = max(row_align, _round_down(min(int(row_tile), M), row_align))

    # --- Resident-weight layout budget: tm from VMEM left after the weight. ---
    # Per row: x,res,out double-buffered in storage dtype + ~4 f32 epilogue temps.
    per_row_res = (2 * 2 + 2) * H * in_isz + 4 * H * 4
    fixed_res = H * H * w_isz + 8 * H * 4 + (1 << 20)
    tm_fit = (budget - fixed_res) // per_row_res if budget > fixed_res else 0
    resident_ok = tm_fit >= min(row_align, M)

    use_resident = (force_k_tiles is None) and (resident_ok or H % 128 != 0)

    if use_resident:
        if M < row_align:
            tm = M
        else:
            tm = max(row_align, _round_down(min(tm_fit, tm_cap), row_align))
        grid = (pl.cdiv(M, tm),)
        need = fixed_res + tm * per_row_res
        vmem_limit = int(min(max(need, 16 << 20), budget))
        cost = pl.CostEstimate(
            flops=2 * M * H * H + 10 * M * H,
            transcendentals=M,
            bytes_accessed=3 * M * H * in_isz + H * H * w_isz + 3 * H * 4)

        out2d = pl.pallas_call(
            functools.partial(_fusion_kernel_resident, eps=eps, mxu_dtype=mxu_dtype),
            out_shape=jax.ShapeDtypeStruct((M, H), dtype),
            grid_spec=pltpu.PrefetchScalarGridSpec(
                num_scalar_prefetch=0,
                grid=grid,
                in_specs=[
                    pl.BlockSpec((tm, H), lambda i: (i, 0)),   # x tile
                    pl.BlockSpec((tm, H), lambda i: (i, 0)),   # residual tile
                    pl.BlockSpec((H, H), lambda i: (0, 0)),    # weight (out,in), resident
                    pl.BlockSpec((3, H), lambda i: (0, 0)),    # bias/gamma/beta
                ],
                out_specs=pl.BlockSpec((tm, H), lambda i: (i, 0)),
            ),
            compiler_params=pltpu.CompilerParams(
                dimension_semantics=("parallel",),
                vmem_limit_bytes=vmem_limit),
            cost_estimate=cost,
        )(x2d, r2d, w_in, params)
    else:
        # --- K-tiled fallback: stream (H, tk) weight slabs, f32 accumulator. ---
        if force_k_tiles is not None:
            nk = int(force_k_tiles)
            if H % nk != 0:
                raise ValueError("force_k_tiles must divide H")
            tk = H // nk
            if tk % 128 != 0 and tk != H:
                raise ValueError("K tile must be a multiple of 128 (or == H)")
        else:
            tk = _choose_tk(H)
            nk = H // tk

        per_row_kt = 2 * tk * in_isz + 4 * H * in_isz + H * 4 + 3 * H * 4
        fixed_kt = 2 * H * tk * w_isz + 8 * H * 4 + (1 << 20)
        tm_fit_kt = (budget - fixed_kt) // per_row_kt if budget > fixed_kt else row_align
        if M < row_align:
            tm = M
        else:
            tm = max(row_align, _round_down(min(tm_fit_kt, tm_cap), row_align))
        grid = (pl.cdiv(M, tm), nk)
        need = fixed_kt + tm * per_row_kt
        vmem_limit = int(min(max(need, 16 << 20), budget))
        cost = pl.CostEstimate(
            flops=2 * M * H * H + 10 * M * H,
            transcendentals=M,
            bytes_accessed=3 * M * H * in_isz + grid[0] * H * H * w_isz + 3 * H * 4)

        out2d = pl.pallas_call(
            functools.partial(_fusion_kernel_ktiled, eps=eps, mxu_dtype=mxu_dtype),
            out_shape=jax.ShapeDtypeStruct((M, H), dtype),
            grid_spec=pltpu.PrefetchScalarGridSpec(
                num_scalar_prefetch=0,
                grid=grid,
                in_specs=[
                    pl.BlockSpec((tm, tk), lambda i, k: (i, k)),   # x K-slab
                    pl.BlockSpec((tm, H), lambda i, k: (i, 0)),    # residual (fetched once / i)
                    pl.BlockSpec((H, tk), lambda i, k: (0, k)),    # weight K-slab (out,in)
                    pl.BlockSpec((3, H), lambda i, k: (0, 0)),     # bias/gamma/beta
                ],
                out_specs=pl.BlockSpec((tm, H), lambda i, k: (i, 0)),
                scratch_shapes=[pltpu.VMEM((tm, H), jnp.float32)],
            ),
            compiler_params=pltpu.CompilerParams(
                dimension_semantics=("parallel", "arbitrary"),
                vmem_limit_bytes=vmem_limit),
            cost_estimate=cost,
        )(x2d, r2d, w_in, params)

    return out2d.reshape(B, S, H)


# ----------------------------------------------------------------------------- reference
def _reference(hidden_states, input_tensor, weight, bias, gamma, beta, eps=1e-12):
    h = jnp.einsum("bsh,oh->bso", hidden_states, weight) + bias
    y = h + input_tensor
    mean = jnp.mean(y, axis=-1, keepdims=True)
    var = jnp.mean((y - mean) ** 2, axis=-1, keepdims=True)
    return (y - mean) * jax.lax.rsqrt(var + eps) * gamma + beta


if __name__ == "__main__":
    eps = 1e-12
    key = jax.random.PRNGKey(0)
    k_x, k_r, k_w, k_b, k_g, k_be, k_x2, k_r2, k_w2 = jax.random.split(key, 9)

    # --- Test 1: module-sized shapes (B=2, S=8, H=32), f32, resident path. ---
    B, S, H = 2, 8, 32
    hidden_states = jax.random.normal(k_x, (B, S, H), dtype=jnp.float32)
    input_tensor = jax.random.normal(k_r, (B, S, H), dtype=jnp.float32)
    weight = jax.random.normal(k_w, (H, H), dtype=jnp.float32) * 0.02   # (out, in)
    bias = jax.random.normal(k_b, (H,), dtype=jnp.float32) * 0.01
    gamma = 1.0 + 0.1 * jax.random.normal(k_g, (H,), dtype=jnp.float32)
    beta = 0.1 * jax.random.normal(k_be, (H,), dtype=jnp.float32)

    out = jax.block_until_ready(
        ud_repr_fusion_layer(hidden_states, input_tensor, weight, bias, gamma, beta, eps=eps))
    ref = _reference(hidden_states, input_tensor, weight, bias, gamma, beta, eps)
    assert out.shape == (B, S, H)
    assert jnp.allclose(out, ref, atol=2e-4, rtol=2e-4), "f32 resident path mismatch"

    # --- Test 2: bf16 MXU path (weight cast once, activations cast in VMEM). ---
    out_bf = jax.block_until_ready(
        ud_repr_fusion_layer(hidden_states, input_tensor, weight, bias, gamma, beta,
                             eps=eps, compute_dtype=jnp.bfloat16))
    assert jnp.allclose(out_bf, ref, atol=5e-2, rtol=5e-2), "bf16 MXU path mismatch"

    # --- Test 3: ragged row count + forced K-tiled fallback (H=256, 2 K tiles). ---
    B2, S2, H2 = 2, 13, 256
    hs2 = jax.random.normal(k_x2, (B2, S2, H2), dtype=jnp.float32)
    rs2 = jax.random.normal(k_r2, (B2, S2, H2), dtype=jnp.float32)
    w2 = jax.random.normal(k_w2, (H2, H2), dtype=jnp.float32) * 0.02
    b2 = jnp.zeros((H2,), jnp.float32)
    g2 = jnp.ones((H2,), jnp.float32)
    be2 = jnp.zeros((H2,), jnp.float32)
    out2 = jax.block_until_ready(
        ud_repr_fusion_layer(hs2, rs2, w2, b2, g2, be2, eps=eps, force_k_tiles=2))
    ref2 = _reference(hs2, rs2, w2, b2, g2, be2, eps)
    assert out2.shape == (B2, S2, H2)
    assert jnp.allclose(out2, ref2, atol=5e-3, rtol=5e-3), "K-tiled path mismatch"

    print("KERNEL_OK")
</pallas_src>

<mosaic_0001>
module attributes {stable_mosaic.version = 11 : i64} {
  func.func @_fusion_kernel_resident(%arg0: i32, %arg1: memref<16x32xf32, #tpu.memory_space<vmem>>, %arg2: memref<16x32xf32, #tpu.memory_space<vmem>>, %arg3: memref<32x32xf32, #tpu.memory_space<vmem>>, %arg4: memref<3x32xf32, #tpu.memory_space<vmem>>, %arg5: memref<16x32xf32, #tpu.memory_space<vmem>>) attributes {dimension_semantics = [#tpu.dimension_semantics<parallel>], iteration_bounds = array<i64: 1>, scalar_prefetch = 0 : i64, scratch_operands = 0 : i64, tpu.core_type = #tpu.core_type<tc>, window_params = [{transform_indices = @transform_0, window_bounds = array<i64: 16, 32>}, {transform_indices = @transform_1, window_bounds = array<i64: 16, 32>}, {pipeline_mode = #tpu.pipeline_mode<synchronous>, transform_indices = @transform_2, window_bounds = array<i64: 32, 32>}, {pipeline_mode = #tpu.pipeline_mode<synchronous>, transform_indices = @transform_3, window_bounds = array<i64: 3, 32>}, {transform_indices = @transform_4, window_bounds = array<i64: 16, 32>}]} {
    %c0 = arith.constant 0 : index
    %c0_0 = arith.constant 0 : index
    %0 = vector.load %arg1[%c0, %c0_0] : memref<16x32xf32, #tpu.memory_space<vmem>>, vector<16x32xf32>
    %c0_1 = arith.constant 0 : index
    %c0_2 = arith.constant 0 : index
    %1 = vector.load %arg3[%c0_1, %c0_2] : memref<32x32xf32, #tpu.memory_space<vmem>>, vector<32x32xf32>
    %cst = arith.constant dense<0.000000e+00> : vector<16x32xf32>
    %2 = tpu.matmul %0, %1, %cst {dimension_numbers = #tpu.dot_dimension_numbers<[1], [1], [0], [0], [0, 0, 1, 0], [], []>} : vector<16x32xf32>, vector<32x32xf32>, vector<16x32xf32> -> vector<16x32xf32>
    %c0_3 = arith.constant 0 : index
    %c0_4 = arith.constant 0 : index
    %3 = vector.load %arg4[%c0_3, %c0_4] : memref<3x32xf32, #tpu.memory_space<vmem>>, vector<3x32xf32>
    %4 = vector.extract_strided_slice %3 {offsets = [0, 0], sizes = [1, 32], strides = [1, 1]} : vector<3x32xf32> to vector<1x32xf32>
    %5 = vector.extract_strided_slice %3 {offsets = [1, 0], sizes = [1, 32], strides = [1, 1]} : vector<3x32xf32> to vector<1x32xf32>
    %6 = vector.extract_strided_slice %3 {offsets = [2, 0], sizes = [1, 32], strides = [1, 1]} : vector<3x32xf32> to vector<1x32xf32>
    %7 = vector.broadcast %4 : vector<1x32xf32> to vector<16x32xf32>
    %8 = arith.addf %2, %7 : vector<16x32xf32>
    %c0_5 = arith.constant 0 : index
    %c0_6 = arith.constant 0 : index
    %9 = vector.load %arg2[%c0_5, %c0_6] : memref<16x32xf32, #tpu.memory_space<vmem>>, vector<16x32xf32>
    %10 = arith.addf %8, %9 : vector<16x32xf32>
    %cst_7 = arith.constant dense<0.000000e+00> : vector<16xf32>
    %11 = vector.multi_reduction <add>, %10, %cst_7 [1] : vector<16x32xf32> to vector<16xf32>
    %12 = vector.shape_cast %11 : vector<16xf32> to vector<16x1xf32>
    %13 = arith.mulf %10, %10 : vector<16x32xf32>
    %cst_8 = arith.constant dense<0.000000e+00> : vector<16xf32>
    %14 = vector.multi_reduction <add>, %13, %cst_8 [1] : vector<16x32xf32> to vector<16xf32>
    %15 = vector.shape_cast %14 : vector<16xf32> to vector<16x1xf32>
    %cst_9 = arith.constant 3.125000e-02 : f32
    %16 = vector.broadcast %cst_9 : f32 to vector<16x1xf32>
    %17 = arith.mulf %12, %16 : vector<16x1xf32>
    %cst_10 = arith.constant 3.125000e-02 : f32
    %18 = vector.broadcast %cst_10 : f32 to vector<16x1xf32>
    %19 = arith.mulf %15, %18 : vector<16x1xf32>
    %20 = arith.mulf %17, %17 : vector<16x1xf32>
    %21 = arith.subf %19, %20 : vector<16x1xf32>
    %cst_11 = arith.constant 0.000000e+00 : f32
    %22 = vector.broadcast %cst_11 : f32 to vector<16x1xf32>
    %23 = arith.maximumf %21, %22 : vector<16x1xf32>
    %cst_12 = arith.constant 9.99999996E-13 : f32
    %24 = vector.broadcast %cst_12 : f32 to vector<16x1xf32>
    %25 = arith.addf %23, %24 : vector<16x1xf32>
    %26 = math.rsqrt %25 : vector<16x1xf32>
    %27 = vector.broadcast %17 : vector<16x1xf32> to vector<16x32xf32>
    %28 = arith.subf %10, %27 : vector<16x32xf32>
    %29 = vector.broadcast %26 : vector<16x1xf32> to vector<16x32xf32>
    %30 = vector.broadcast %5 : vector<1x32xf32> to vector<16x32xf32>
    %31 = arith.mulf %29, %30 : vector<16x32xf32>
    %32 = arith.mulf %28, %31 : vector<16x32xf32>
    %33 = vector.broadcast %6 : vector<1x32xf32> to vector<16x32xf32>
    %34 = arith.addf %32, %33 : vector<16x32xf32>
    %c0_13 = arith.constant 0 : index
    %c0_14 = arith.constant 0 : index
    %35 = vector.load %arg5[%c0_13, %c0_14] : memref<16x32xf32, #tpu.memory_space<vmem>>, vector<16x32xf32>
    tpu.vector_store %arg5[%c0_13, %c0_14], %34 {strides = array<i32>} : memref<16x32xf32, #tpu.memory_space<vmem>>, vector<16x32xf32>,
    return
  }
  func.func @transform_0(%arg0: i32) -> (i32, i32) {
    %c0_i32 = arith.constant 0 : i32
    %c0_i32_0 = arith.constant 0 : i32
    return %arg0, %c0_i32 : i32, i32
  }
  func.func @transform_1(%arg0: i32) -> (i32, i32) {
    %c0_i32 = arith.constant 0 : i32
    %c0_i32_0 = arith.constant 0 : i32
    return %arg0, %c0_i32 : i32, i32
  }
  func.func @transform_2(%arg0: i32) -> (i32, i32) {
    %c0_i32 = arith.constant 0 : i32
    %c0_i32_0 = arith.constant 0 : i32
    %c0_i32_1 = arith.constant 0 : i32
    return %c0_i32, %c0_i32_0 : i32, i32
  }
  func.func @transform_3(%arg0: i32) -> (i32, i32) {
    %c0_i32 = arith.constant 0 : i32
    %c0_i32_0 = arith.constant 0 : i32
    %c0_i32_1 = arith.constant 0 : i32
    return %c0_i32, %c0_i32_0 : i32, i32
  }
  func.func @transform_4(%arg0: i32) -> (i32, i32) {
    %c0_i32 = arith.constant 0 : i32
    %c0_i32_0 = arith.constant 0 : i32
    return %arg0, %c0_i32 : i32, i32
  }
}

</mosaic_0001>

<llo_original>
// kernel: tpu_custom_call.1
$region0: #{tpu_custom_call.1}
  #allocation0 [shape = 'u32[]', space=smem, size = 0x4, offset = 0x4, fixed_abs, tag = 'smem constant byte address 0x4 - core index']
  #allocation1 [shape = 'u32[72,128]{1,0:T(1,128)}', space=vmem, size = 0x9000, scoped, tag = 'internal scratch']
  %s0 = inlined_call_operand.hbm [shape: f32[16,32], index: 0, kind: input, shape index: {}]
  %s1 = inlined_call_operand.hbm [shape: f32[16,32], index: 1, kind: input, shape index: {}]
  %s2 = inlined_call_operand.hbm [shape: f32[32,32], index: 2, kind: input, shape index: {}]
  %s3 = inlined_call_operand.hbm [shape: f32[3,32], index: 3, kind: input, shape index: {}]
  %s4 = inlined_call_operand.hbm [shape: f32[16,32], index: 4, kind: output, shape index: {}]
  %s5 = sld [smem:[#allocation0]]
  $region42: #{tpu_custom_call.1} parent=0
    _
  %s7 = ssub.s32 1, %s5
  %s8 = scalar_select 0, %s7, %s5
  $region1: #{tpu_custom_call.1} parent=0
    #allocation2 [shape = 'u8[8192]{0}', space=vmem, size = 0x2000, scoped, tag = 'input window, operand 0, single buffered']
    #allocation3 [shape = 's32[1]{0}', space=sflag, size = 0x4, scoped, tag = 'scoped memory for tpu_custom_call.1']
    #allocation4 [shape = 's32[1]{0}', space=sflag, size = 0x4, scoped, tag = 'scoped memory for tpu_custom_call.1']
    #allocation5 [shape = 'u8[8192]{0}', space=vmem, size = 0x2000, scoped, tag = 'input window, operand 1, single buffered']
    #allocation6 [shape = 's32[1]{0}', space=sflag, size = 0x4, scoped, tag = 'scoped memory for tpu_custom_call.1']
    #allocation7 [shape = 'u8[16384]{0}', space=vmem, size = 0x4000, scoped, tag = 'input window, operand 2, single buffered']
    #allocation8 [shape = 'u8[2048]{0}', space=vmem, size = 0x800, scoped, tag = 'input window, operand 3, single buffered']
    #allocation9 [shape = 's32[1]{0}', space=sflag, size = 0x4, scoped, tag = 'scoped memory for tpu_custom_call.1']
    #allocation10 [shape = 'u8[8192]{0}', space=vmem, size = 0x2000, scoped, tag = 'output window, operand 0, single buffered']
    %9 = vsyncpa [#allocation3], 0
    %10 = vsyncpa [#allocation6], 0
    %11 = vsyncpa [#allocation9], 0
    %12 = vsyncpa [#allocation4], 0
    // Predicated region
    $region2: #{tpu_custom_call.1} parent=1 // pred_check
      _
    $region3: #{tpu_custom_call.1} parent=1 // pred_check_branch
      %14 = sbr.rel (0) target = $region5
    $region4: #{tpu_custom_call.1} parent=1 // pred_region
      %16 = vsyncadd [#allocation3], 0
      %s17 = sshll.u32 %s0, 4
      %s18 = int_to_ptr.hbm [resolvable:$true] %s17
      %s19 = sshll.u32 [#allocation2], 4
      %s20 = int_to_ptr.vmem [resolvable:$true] %s19
      %25 = dma.hbm_to_vmem [thread:$0]  %s18, 256, %s20, [#allocation3], 128, 128, 8
    $region5: #{tpu_custom_call.1} parent=1 // pred_fallthru
      _
    // Predicated region
    $region6: #{tpu_custom_call.1} parent=1 // pred_check
      _
    $region7: #{tpu_custom_call.1} parent=1 // pred_check_branch
      %27 = sbr.rel (0) target = $region9
    $region8: #{tpu_custom_call.1} parent=1 // pred_region
      %29 = vsyncadd [#allocation6], 0
      %s30 = sshll.u32 %s1, 4
      %s31 = int_to_ptr.hbm [resolvable:$true] %s30
      %s32 = sshll.u32 [#allocation5], 4
      %s33 = int_to_ptr.vmem [resolvable:$true] %s32
      %38 = dma.hbm_to_vmem [thread:$0]  %s31, 256, %s33, [#allocation6], 128, 128, 8
    $region9: #{tpu_custom_call.1} parent=1 // pred_fallthru
      _
    // Predicated region
    $region10: #{tpu_custom_call.1} parent=1 // pred_check
      _
    $region11: #{tpu_custom_call.1} parent=1 // pred_check_branch
      %40 = sbr.rel (0) target = $region13
    $region12: #{tpu_custom_call.1} parent=1 // pred_region
      %42 = vsyncadd [#allocation6], 0
      %s43 = sshll.u32 %s2, 4
      %s44 = int_to_ptr.hbm [resolvable:$true] %s43
      %s45 = sshll.u32 [#allocation7], 4
      %s46 = int_to_ptr.vmem [resolvable:$true] %s45
      %51 = dma.hbm_to_vmem [thread:$0]  %s44, 512, %s46, [#allocation6], 128, 128, 8
    $region13: #{tpu_custom_call.1} parent=1 // pred_fallthru
      _
    // Predicated region
    $region14: #{tpu_custom_call.1} parent=1 // pred_check
      _
    $region15: #{tpu_custom_call.1} parent=1 // pred_check_branch
      %53 = sbr.rel (0) target = $region17
    $region16: #{tpu_custom_call.1} parent=1 // pred_region
      %55 = vsyncadd [#allocation9], 0
      %s57 = sshll.u32 %s3, 4
      %s58 = int_to_ptr.hbm [resolvable:$true] %s57
      %s59 = sshll.u32 [#allocation8], 4
      %s60 = int_to_ptr.vmem [resolvable:$true] %s59
      %62 = dma.hbm_to_vmem [thread:$0]  %s58, 64, %s60, [#allocation9]
    $region17: #{tpu_custom_call.1} parent=1 // pred_fallthru
      _
    // Predicated region
    $region18: #{tpu_custom_call.1} parent=1 // pred_check
      _
    $region19: #{tpu_custom_call.1} parent=1 // pred_check_branch
      %64 = sbr.rel (0) target = $region21
    $region20: #{tpu_custom_call.1} parent=1 // pred_region
      %66 = dma.done [#allocation3], 256
    $region21: #{tpu_custom_call.1} parent=1 // pred_fallthru
      _
    // Predicated region
    $region22: #{tpu_custom_call.1} parent=1 // pred_check
      _
    $region23: #{tpu_custom_call.1} parent=1 // pred_check_branch
      %68 = sbr.rel (0) target = $region25
    $region24: #{tpu_custom_call.1} parent=1 // pred_region
      %70 = dma.done [#allocation6], 256
    $region25: #{tpu_custom_call.1} parent=1 // pred_fallthru
      _
    // Predicated region
    $region26: #{tpu_custom_call.1} parent=1 // pred_check
      _
    $region27: #{tpu_custom_call.1} parent=1 // pred_check_branch
      %72 = sbr.rel (0) target = $region29
    $region28: #{tpu_custom_call.1} parent=1 // pred_region
      %74 = dma.done [#allocation6], 512
    $region29: #{tpu_custom_call.1} parent=1 // pred_fallthru
      _
    // Predicated region
    $region30: #{tpu_custom_call.1} parent=1 // pred_check
      _
    $region31: #{tpu_custom_call.1} parent=1 // pred_check_branch
      %76 = sbr.rel (0) target = $region33
    $region32: #{tpu_custom_call.1} parent=1 // pred_region
      %78 = dma.done [#allocation9], 64
    $region33: #{tpu_custom_call.1} parent=1 // pred_fallthru
      _
    %v79 = vld [vmem:[#allocation2] sm:$0xff]
    %v80 = vld [vmem:[#allocation2 + $0x8] sm:$0xff]
    %v81 = vld [vmem:[#allocation7] sm:$0xff]
    %v82 = vld [vmem:[#allocation7 + $0x8] sm:$0xff]
    %v83 = vld [vmem:[#allocation7 + $0x10] sm:$0xff]
    %v84 = vld [vmem:[#allocation7 + $0x18] sm:$0xff]
    %v85 = vld [vmem:[#allocation8] sm:$0x7]
    %v86 = vperm.slane %v85, 0
    %vm87 = vcmask 261120
    %v89 = vsel %vm87, %v79, 0
    %v92 = vsel %vm87, %v80, 0
    %v95 = vsel %vm87, %v81, 0
    %v98 = vsel %vm87, %v82, 0
    %v101 = vsel %vm87, %v83, 0
    %v104 = vsel %vm87, %v84, 0
    %106 = vmatpush.xpose.msra.mxu0 0.0
    %107 = vmatpush.xpose.msra.mxu0 0.0
    %108 = vmatpush.xpose.msra.mxu0 0.0
    %109 = vmatpush.xpose.msra.mxu0 0.0
    %110 = vmatpush.xpose.msra.mxu0 0.0
    %111 = vmatpush.xpose.msra.mxu0 0.0
    %112 = vmatpush.xpose.msra.mxu0 0.0
    %113 = vmatpush.xpose.msra.mxu0 0.0
    %114 = vmatpush.xpose.msra.mxu0 0.0
    %115 = vmatpush.xpose.msra.mxu0 0.0
    %116 = vmatpush.xpose.msra.mxu0 0.0
    %117 = vmatpush.xpose.msra.mxu0 0.0
    %118 = vmatpush.xpose.msra.mxu0 %v104
    %119 = vmatpush.xpose.msra.mxu0 %v101
    %120 = vmatpush.xpose.msra.mxu0 %v98
    %121 = vmatpush.xpose.msra.mxu0 %v95
    %122 = vmatmul.f32.gmra.mxu0 %v89
    %v123 = vpop.f32.mrf.mxu0
    %v124 = vadd.f32 %v86, %v123
    %125 = vmatmul.f32.gmra.mxu0 %v92
    %v126 = vpop.f32.mrf.mxu0
    %v127 = vadd.f32 %v86, %v126
    %128 = vdwg.mxu0
    %v129 = vld [vmem:[#allocation5] sm:$0xff]
    %v130 = vld [vmem:[#allocation5 + $0x8] sm:$0xff]
    %v131 = vadd.f32 %v124, %v129
    %v132 = vadd.f32 %v127, %v130
    %v133 = vsel %vm87, %v131, 0.0
    %134 = vadd.xlane.f32.xlu0 %v133
    %v135 = vpop.xlane.xlu0 %134
    %v136 = vsel %vm87, %v132, 0.0
    %137 = vadd.xlane.f32.xlu0 %v136
    %v138 = vpop.xlane.xlu0 %137
    %v139 = vmul.f32 %v131, %v131
    %v140 = vmul.f32 %v132, %v132
    %v141 = vsel %vm87, %v139, 0.0
    %142 = vadd.xlane.f32.xlu0 %v141
    %v143 = vpop.xlane.xlu0 %142
    %v144 = vsel %vm87, %v140, 0.0
    %145 = vadd.xlane.f32.xlu0 %v144
    %v146 = vpop.xlane.xlu0 %145
    %v147 = vmul.f32 %v135, 0.03125
    %v148 = vmul.f32 %v138, 0.03125
    %v149 = vmul.f32 %v143, 0.03125
    %v150 = vmul.f32 %v146, 0.03125
    %v151 = vmul.f32 %v147, %v147
    %v152 = vmul.f32 %v148, %v148
    %v153 = vsub.f32 %v149, %v151
    %v154 = vsub.f32 %v150, %v152
    %v155 = vmax.f32 %v153, 0.0
    %v156 = vmax.f32 %v154, 0.0
    %v157 = vadd.f32 %v155, 1e-12
    %v158 = vadd.f32 %v156, 1e-12
    %v159 = vrsqrt.pop %v157
    %v160 = vmul.f32 %v159, %v157
    %v161 = vmul.f32 %v160, %v159
    %v162 = vmul.f32 0.5, %v161
    %v163 = vsub.f32 1.5, %v162
    %v164 = vmul.f32 %v159, %v163
    %vm165 = vweird.f32 %v157
    %vm166 = vweird.f32 %v159
    %vm167 = vmor %vm165, %vm166
    %v168 = vsel %vm167, %v159, %v164
    %v169 = vrsqrt.pop %v158
    %v170 = vmul.f32 %v169, %v158
    %v171 = vmul.f32 %v170, %v169
    %v172 = vmul.f32 0.5, %v171
    %v173 = vsub.f32 1.5, %v172
    %v174 = vmul.f32 %v169, %v173
    %vm175 = vweird.f32 %v158
    %vm176 = vweird.f32 %v169
    %vm177 = vmor %vm175, %vm176
    %v178 = vsel %vm177, %v169, %v174
    %v179 = vsub.f32 %v131, %v147
    %v180 = vsub.f32 %v132, %v148
    %v181 = vperm.slane %v85, 1
    %v182 = vmul.f32 %v168, %v181
    %v183 = vmul.f32 %v178, %v181
    %v184 = vmul.f32 %v179, %v182
    %v185 = vmul.f32 %v180, %v183
    %v186 = vperm.slane %v85, 2
    %v187 = vadd.f32 %v184, %v186
    %v188 = vadd.f32 %v185, %v186
    %189 = vst.msk [vmem:[#allocation10] sm:$0xff] %vm87, %v187
    %190 = vst.msk [vmem:[#allocation10 + $0x8] sm:$0xff] %vm87, %v188
    // Predicated region
    $region34: #{tpu_custom_call.1} parent=1 // pred_check
      _
    $region35: #{tpu_custom_call.1} parent=1 // pred_check_branch
      %192 = sbr.rel (0) target = $region37
    $region36: #{tpu_custom_call.1} parent=1 // pred_region
      %194 = vsyncadd [#allocation4], 0
      %s195 = sshll.u32 [#allocation10], 4
      %s196 = int_to_ptr.vmem [resolvable:$true] %s195
      %s197 = sshll.u32 %s4, 4
      %s198 = int_to_ptr.hbm [resolvable:$true] %s197
      %203 = dma.vmem_to_hbm [thread:$0]  %s196, 256, %s198, [#allocation4], 128, 128, 8
    $region37: #{tpu_custom_call.1} parent=1 // pred_fallthru
      _
    // Predicated region
    $region38: #{tpu_custom_call.1} parent=1 // pred_check
      _
    $region39: #{tpu_custom_call.1} parent=1 // pred_check_branch
      %205 = sbr.rel (0) target = $region41
    $region40: #{tpu_custom_call.1} parent=1 // pred_region
      %207 = dma.done [#allocation4], 256
    $region41: #{tpu_custom_call.1} parent=1 // pred_fallthru
      _
    %208 = vsyncpa [#allocation3], 1
    %209 = vsyncpa [#allocation6], 1
    %210 = vsyncpa [#allocation9], 1
    %211 = vsyncpa [#allocation4], 1

</llo_original>
